<compile_context>
chip_gen: v5e
topology: v5e:2x2
jax: 0.10.0
libtpu: 0.0.40
codegen_flags: <defaults>
</compile_context>

<pallas_src>
import functools

import jax
import jax.numpy as jnp
from jax.experimental import pallas as pl
from jax.experimental.pallas import tpu as pltpu


def _round_up(a, b):
    return (a + b - 1) // b * b


def _sublane_multiple(dtype):
    bits = jnp.dtype(dtype).itemsize * 8
    return max(8, 256 // bits)          # 8 for f32, 16 for bf16, 32 for int8/fp8


def _vmem_capacity_bytes():
    try:
        return int(pltpu.get_tpu_info().vmem_capacity_bytes)
    except Exception:
        return 64 * 1024 * 1024         # conservative fallback (v7x physical VMEM)


# ---------------------------------------------------------------------------
# Fused single-pass kernel: one (tb, C, HW) slab per grid step.
# ---------------------------------------------------------------------------
def _ca_fused_kernel(x_ref, w1t_ref, b1_ref, w2t_ref, b2_ref, o_ref, *, inv_hw):
    # Global average pool (f32 accumulation), lane-dense (tb, C) result.
    pooled = jnp.sum(x_ref[...], axis=-1, dtype=jnp.float32) * inv_hw   # (tb, C)

    # 1x1 convs as small row-major matmuls (lane-dense outputs).
    y1 = jnp.maximum(
        jnp.dot(pooled, w1t_ref[...], preferred_element_type=jnp.float32)
        + b1_ref[...], 0.0)                                             # (tb, Cm)
    y2 = jax.nn.sigmoid(
        jnp.dot(y1, w2t_ref[...], preferred_element_type=jnp.float32)
        + b2_ref[...])                                                  # (tb, C)

    # Rescale in the input dtype (no per-element f32 upcast/downcast); the
    # tiny scale tensor is cast down once.
    scale = y2.astype(o_ref.dtype)[:, :, None]                          # (tb, C, 1)
    o_ref[...] = x_ref[...] * scale


# ---------------------------------------------------------------------------
# Two-pass fallback, pass 1: tiled pooling reduction + MLP in the finalize.
# Emits scale already in (C, 1) (sublane) orientation.
# ---------------------------------------------------------------------------
def _ca_pool_mlp_kernel(x_ref, w1_ref, b1_ref, w2_ref, b2_ref, s_ref, acc_ref,
                        *, inv_hw):
    t = pl.program_id(1)

    @pl.when(t == 0)
    def _init():
        acc_ref[...] = jnp.zeros_like(acc_ref)

    acc_ref[...] += jnp.sum(x_ref[...], axis=-1, keepdims=True,
                            dtype=jnp.float32)                          # (C, 1)

    @pl.when(t == pl.num_programs(1) - 1)
    def _finalize():
        pooled = acc_ref[...] * inv_hw                                  # (C, 1)
        y1 = jnp.maximum(
            jnp.dot(w1_ref[...], pooled, preferred_element_type=jnp.float32)
            + b1_ref[...], 0.0)                                         # (Cm, 1)
        y2 = jax.nn.sigmoid(
            jnp.dot(w2_ref[...], y1, preferred_element_type=jnp.float32)
            + b2_ref[...])                                              # (C, 1)
        s_ref[...] = y2


# ---------------------------------------------------------------------------
# Two-pass fallback, pass 2: tiled elementwise rescale (no transposes).
# ---------------------------------------------------------------------------
def _ca_rescale_kernel(s_ref, x_ref, o_ref):
    o_ref[...] = x_ref[...] * s_ref[...].astype(o_ref.dtype)


def ca_layer(x, w1, b1, w2, b2, *, force_two_pass=False):
    """Channel-attention layer (PyTorch CALayer forward).

    x:  (N, C, H, W)
    w1: (C_mid, C)   -- Conv2d(C, C_mid, 1) weight squeezed
    b1: (C_mid,)
    w2: (C, C_mid)   -- Conv2d(C_mid, C, 1) weight squeezed
    b2: (C,)
    """
    N, C, H, W = x.shape
    C_mid = w1.shape[0]
    HW = H * W
    itemsize = jnp.dtype(x.dtype).itemsize
    inv_hw = 1.0 / float(HW)

    x3 = x.reshape(N, C, HW)            # free reshape, no extra HBM traffic

    # VMEM-layout footprint estimates (no host-side padding is done; these
    # account for the internal sublane/lane padding of the blocks).
    sub = _sublane_multiple(x.dtype)
    C_lay = _round_up(C, sub)
    C_lay32 = _round_up(C, 8)
    Cm_lay32 = _round_up(max(C_mid, 1), 8)
    HW_lay = _round_up(HW, 128)
    elem_io = C_lay * HW_lay * itemsize          # one image, one buffer
    elem_f32 = C_lay32 * HW_lay * 4              # slack for f32 pooling temp
    weight_bytes = 2 * 4 * (2 * C_lay32 * Cm_lay32 + C_lay32 + Cm_lay32) + (256 << 10)
    margin = 2 << 20

    vmem_cap = _vmem_capacity_bytes()
    budget = int(0.70 * vmem_cap)                # tile-sizing budget
    limit_cap = int(0.80 * vmem_cap)             # ceiling for vmem_limit_bytes

    per_image = 4 * elem_io + elem_f32           # in+out double-buffered + temp
    fused_fits = (per_image + weight_bytes + margin) <= budget

    if fused_fits and not force_two_pass:
        # ---------------- fused single-pass path ---------------------------
        w1t = w1.T.astype(jnp.float32)                 # (C, C_mid)
        b1r = b1.reshape(1, -1).astype(jnp.float32)    # (1, C_mid)
        w2t = w2.T.astype(jnp.float32)                 # (C_mid, C)
        b2r = b2.reshape(1, -1).astype(jnp.float32)    # (1, C)

        # Batch elements per step: biggest that fits VMEM, aiming at ~16 MiB
        # of HBM traffic per step, with >= 4 grid steps when N allows
        # (>= 2 steps per TensorCore on v7x so the pipeline has overlap).
        tb_vmem = max(1, (budget - weight_bytes - margin) // per_image)
        tb_traffic = max(1, (16 << 20) // max(1, 2 * C * HW * itemsize))
        tb = max(1, min(N, tb_vmem, tb_traffic))
        if N >= 4 and N // tb < 4:
            tb = max(1, N // 4)
        while N % tb:
            tb -= 1

        needed = tb * per_image + weight_bytes + margin
        vmem_limit = min(limit_cap, max(int(needed), 16 << 20))

        kernel = functools.partial(_ca_fused_kernel, inv_hw=inv_hw)
        out = pl.pallas_call(
            kernel,
            out_shape=jax.ShapeDtypeStruct((N, C, HW), x.dtype),
            grid_spec=pltpu.PrefetchScalarGridSpec(
                num_scalar_prefetch=0,
                grid=(N // tb,),
                in_specs=[
                    pl.BlockSpec((tb, C, HW), lambda i: (i, 0, 0)),
                    pl.BlockSpec((C, C_mid), lambda i: (0, 0)),
                    pl.BlockSpec((1, C_mid), lambda i: (0, 0)),
                    pl.BlockSpec((C_mid, C), lambda i: (0, 0)),
                    pl.BlockSpec((1, C), lambda i: (0, 0)),
                ],
                out_specs=pl.BlockSpec((tb, C, HW), lambda i: (i, 0, 0)),
            ),
            compiler_params=pltpu.CompilerParams(
                dimension_semantics=("parallel",),
                vmem_limit_bytes=vmem_limit),
        )(x3, w1t, b1r, w2t, b2r)
        return out.reshape(N, C, H, W)

    # -------------------- two-pass tiled fallback ---------------------------
    # TODO(synk): extremely large C (where even a (C, 128) tile overflows VMEM)
    # would additionally need channel tiling; not implemented.
    w1c = w1.astype(jnp.float32)                   # (C_mid, C)
    b1c = b1.reshape(-1, 1).astype(jnp.float32)    # (C_mid, 1)
    w2c = w2.astype(jnp.float32)                   # (C, C_mid)
    b2c = b2.reshape(-1, 1).astype(jnp.float32)    # (C, 1)

    HW_pad = _round_up(HW, 128)
    x_w = x3 if HW_pad == HW else jnp.pad(x3, ((0, 0), (0, 0), (0, HW_pad - HW)))

    def pick_tile(n_bufs):
        # Largest multiple of 128 that divides HW_pad and whose n_bufs
        # double-buffered copies fit the VMEM sizing budget.
        per_128 = n_bufs * C_lay * itemsize * 128
        cap_d = max(1, (budget - weight_bytes - margin) // max(1, per_128))
        m = HW_pad // 128
        cap_d = min(cap_d, m)
        for d in range(cap_d, 0, -1):
            if m % d == 0:
                return d * 128
        return 128

    t_hw1 = pick_tile(2)          # pass 1: input only, double-buffered
    t_hw2 = pick_tile(4)          # pass 2: input + output, double-buffered
    n_t1 = HW_pad // t_hw1
    n_t2 = HW_pad // t_hw2

    lim1 = min(limit_cap,
               max(2 * C_lay * t_hw1 * itemsize + weight_bytes + margin, 16 << 20))
    lim2 = min(limit_cap,
               max(4 * C_lay * t_hw2 * itemsize + margin, 16 << 20))

    # Pass 1: pooled sums (accumulator) + MLP + sigmoid -> (N, C, 1) scale.
    pool_kernel = functools.partial(_ca_pool_mlp_kernel, inv_hw=inv_hw)
    scale = pl.pallas_call(
        pool_kernel,
        out_shape=jax.ShapeDtypeStruct((N, C, 1), jnp.float32),
        grid_spec=pltpu.PrefetchScalarGridSpec(
            num_scalar_prefetch=0,
            grid=(N, n_t1),
            in_specs=[
                pl.BlockSpec((None, C, t_hw1), lambda n, t: (n, 0, t)),
                pl.BlockSpec((C_mid, C), lambda n, t: (0, 0)),
                pl.BlockSpec((C_mid, 1), lambda n, t: (0, 0)),
                pl.BlockSpec((C, C_mid), lambda n, t: (0, 0)),
                pl.BlockSpec((C, 1), lambda n, t: (0, 0)),
            ],
            out_specs=pl.BlockSpec((None, C, 1), lambda n, t: (n, 0, 0)),
            scratch_shapes=[pltpu.VMEM((C, 1), jnp.float32)],
        ),
        compiler_params=pltpu.CompilerParams(
            dimension_semantics=("parallel", "arbitrary"),
            vmem_limit_bytes=lim1),
    )(x_w, w1c, b1c, w2c, b2c)

    # Pass 2: tiled elementwise rescale.
    out = pl.pallas_call(
        _ca_rescale_kernel,
        out_shape=jax.ShapeDtypeStruct((N, C, HW_pad), x.dtype),
        grid_spec=pltpu.PrefetchScalarGridSpec(
            num_scalar_prefetch=0,
            grid=(N, n_t2),
            in_specs=[
                pl.BlockSpec((None, C, 1), lambda n, t: (n, 0, 0)),
                pl.BlockSpec((None, C, t_hw2), lambda n, t: (n, 0, t)),
            ],
            out_specs=pl.BlockSpec((None, C, t_hw2), lambda n, t: (n, 0, t)),
        ),
        compiler_params=pltpu.CompilerParams(
            dimension_semantics=("parallel", "parallel"),
            vmem_limit_bytes=lim2),
    )(scale, x_w)
    if HW_pad != HW:
        out = out[:, :, :HW]
    return out.reshape(N, C, H, W)


def ca_layer_ref(x, w1, b1, w2, b2):
    # Pure-JAX reference matching the PyTorch module.
    pooled = jnp.mean(x, axis=(2, 3), keepdims=True)                    # (N,C,1,1)
    y1 = jax.nn.relu(jnp.einsum('oc,ncij->noij', w1, pooled)
                     + b1.reshape(1, -1, 1, 1))
    y2 = jax.nn.sigmoid(jnp.einsum('oc,ncij->noij', w2, y1)
                        + b2.reshape(1, -1, 1, 1))
    return x * y2


if __name__ == "__main__":
    # Small shapes consistent with the module: batch=2, channels=4, spatial=16.
    N, C, H, W = 2, 4, 16, 16
    reduction = 1
    C_mid = C // reduction

    key = jax.random.PRNGKey(0)
    kx, k1, k2, k3, k4 = jax.random.split(key, 5)

    x = jax.random.normal(kx, (N, C, H, W), dtype=jnp.float32)
    w1 = jax.random.normal(k1, (C_mid, C), dtype=jnp.float32) * 0.2
    b1 = jax.random.normal(k2, (C_mid,), dtype=jnp.float32) * 0.1
    w2 = jax.random.normal(k3, (C, C_mid), dtype=jnp.float32) * 0.2
    b2 = jax.random.normal(k4, (C,), dtype=jnp.float32) * 0.1

    ref = ca_layer_ref(x, w1, b1, w2, b2)

    # Default path (fused single-pass at these shapes).
    out_fused = jax.block_until_ready(ca_layer(x, w1, b1, w2, b2))
    assert out_fused.shape == (N, C, H, W)
    assert jnp.allclose(out_fused, ref, atol=1e-5, rtol=1e-5)

    # Exercise the large-slab two-pass fallback as well.
    out_split = jax.block_until_ready(
        ca_layer(x, w1, b1, w2, b2, force_two_pass=True))
    assert out_split.shape == (N, C, H, W)
    assert jnp.allclose(out_split, ref, atol=1e-5, rtol=1e-5)

    print("KERNEL_OK")
</pallas_src>

<mosaic_0001>
module attributes {stable_mosaic.version = 11 : i64} {
  func.func @_ca_fused_kernel(%arg0: i32, %arg1: memref<2x4x256xf32, #tpu.memory_space<vmem>>, %arg2: memref<4x4xf32, #tpu.memory_space<vmem>>, %arg3: memref<1x4xf32, #tpu.memory_space<vmem>>, %arg4: memref<4x4xf32, #tpu.memory_space<vmem>>, %arg5: memref<1x4xf32, #tpu.memory_space<vmem>>, %arg6: memref<2x4x256xf32, #tpu.memory_space<vmem>>) attributes {dimension_semantics = [#tpu.dimension_semantics<parallel>], iteration_bounds = array<i64: 1>, scalar_prefetch = 0 : i64, scratch_operands = 0 : i64, tpu.core_type = #tpu.core_type<tc>, window_params = [{transform_indices = @transform_0, window_bounds = array<i64: 2, 4, 256>}, {pipeline_mode = #tpu.pipeline_mode<synchronous>, transform_indices = @transform_1, window_bounds = array<i64: 4, 4>}, {pipeline_mode = #tpu.pipeline_mode<synchronous>, transform_indices = @transform_2, window_bounds = array<i64: 1, 4>}, {pipeline_mode = #tpu.pipeline_mode<synchronous>, transform_indices = @transform_3, window_bounds = array<i64: 4, 4>}, {pipeline_mode = #tpu.pipeline_mode<synchronous>, transform_indices = @transform_4, window_bounds = array<i64: 1, 4>}, {transform_indices = @transform_5, window_bounds = array<i64: 2, 4, 256>}]} {
    %c0 = arith.constant 0 : index
    %c0_0 = arith.constant 0 : index
    %c0_1 = arith.constant 0 : index
    %0 = vector.load %arg1[%c0, %c0_0, %c0_1] : memref<2x4x256xf32, #tpu.memory_space<vmem>>, vector<2x4x256xf32>
    %cst = arith.constant dense<0.000000e+00> : vector<2x4xf32>
    %1 = vector.multi_reduction <add>, %0, %cst [2] : vector<2x4x256xf32> to vector<2x4xf32>
    %cst_2 = arith.constant 3.906250e-03 : f32
    %2 = vector.broadcast %cst_2 : f32 to vector<2x4xf32>
    %3 = arith.mulf %1, %2 : vector<2x4xf32>
    %c0_3 = arith.constant 0 : index
    %c0_4 = arith.constant 0 : index
    %4 = vector.load %arg2[%c0_3, %c0_4] : memref<4x4xf32, #tpu.memory_space<vmem>>, vector<4x4xf32>
    %cst_5 = arith.constant dense<0.000000e+00> : vector<2x4xf32>
    %5 = tpu.matmul %3, %4, %cst_5 {dimension_numbers = #tpu.dot_dimension_numbers<[1], [0], [0], [1], [0, 0, 1, 1], [], []>} : vector<2x4xf32>, vector<4x4xf32>, vector<2x4xf32> -> vector<2x4xf32>
    %c0_6 = arith.constant 0 : index
    %c0_7 = arith.constant 0 : index
    %6 = vector.load %arg3[%c0_6, %c0_7] : memref<1x4xf32, #tpu.memory_space<vmem>>, vector<1x4xf32>
    %7 = vector.broadcast %6 : vector<1x4xf32> to vector<2x4xf32>
    %8 = arith.addf %5, %7 : vector<2x4xf32>
    %cst_8 = arith.constant 0.000000e+00 : f32
    %9 = vector.broadcast %cst_8 : f32 to vector<2x4xf32>
    %10 = arith.maximumf %8, %9 : vector<2x4xf32>
    %c0_9 = arith.constant 0 : index
    %c0_10 = arith.constant 0 : index
    %11 = vector.load %arg4[%c0_9, %c0_10] : memref<4x4xf32, #tpu.memory_space<vmem>>, vector<4x4xf32>
    %cst_11 = arith.constant dense<0.000000e+00> : vector<2x4xf32>
    %12 = tpu.matmul %10, %11, %cst_11 {dimension_numbers = #tpu.dot_dimension_numbers<[1], [0], [0], [1], [0, 0, 1, 1], [], []>} : vector<2x4xf32>, vector<4x4xf32>, vector<2x4xf32> -> vector<2x4xf32>
    %c0_12 = arith.constant 0 : index
    %c0_13 = arith.constant 0 : index
    %13 = vector.load %arg5[%c0_12, %c0_13] : memref<1x4xf32, #tpu.memory_space<vmem>>, vector<1x4xf32>
    %14 = vector.broadcast %13 : vector<1x4xf32> to vector<2x4xf32>
    %15 = arith.addf %12, %14 : vector<2x4xf32>
    %16 = arith.negf %15 : vector<2x4xf32>
    %17 = math.exp %16 : vector<2x4xf32>
    %cst_14 = arith.constant 1.000000e+00 : f32
    %18 = vector.broadcast %cst_14 : f32 to vector<2x4xf32>
    %19 = arith.addf %18, %17 : vector<2x4xf32>
    %20 = arith.divf %18, %19 : vector<2x4xf32>
    %21 = vector.shape_cast %20 : vector<2x4xf32> to vector<2x4x1xf32>
    %c0_15 = arith.constant 0 : index
    %c0_16 = arith.constant 0 : index
    %c0_17 = arith.constant 0 : index
    %22 = vector.load %arg1[%c0_15, %c0_16, %c0_17] : memref<2x4x256xf32, #tpu.memory_space<vmem>>, vector<2x4x256xf32>
    %23 = vector.broadcast %21 : vector<2x4x1xf32> to vector<2x4x256xf32>
    %24 = arith.mulf %22, %23 : vector<2x4x256xf32>
    %c0_18 = arith.constant 0 : index
    %c0_19 = arith.constant 0 : index
    %c0_20 = arith.constant 0 : index
    %25 = vector.load %arg6[%c0_18, %c0_19, %c0_20] : memref<2x4x256xf32, #tpu.memory_space<vmem>>, vector<2x4x256xf32>
    tpu.vector_store %arg6[%c0_18, %c0_19, %c0_20], %24 {strides = array<i32>} : memref<2x4x256xf32, #tpu.memory_space<vmem>>, vector<2x4x256xf32>,
    return
  }
  func.func @transform_0(%arg0: i32) -> (i32, i32, i32) {
    %c0_i32 = arith.constant 0 : i32
    %c0_i32_0 = arith.constant 0 : i32
    %c0_i32_1 = arith.constant 0 : i32
    return %arg0, %c0_i32, %c0_i32_0 : i32, i32, i32
  }
  func.func @transform_1(%arg0: i32) -> (i32, i32) {
    %c0_i32 = arith.constant 0 : i32
    %c0_i32_0 = arith.constant 0 : i32
    %c0_i32_1 = arith.constant 0 : i32
    return %c0_i32, %c0_i32_0 : i32, i32
  }
  func.func @transform_2(%arg0: i32) -> (i32, i32) {
    %c0_i32 = arith.constant 0 : i32
    %c0_i32_0 = arith.constant 0 : i32
    %c0_i32_1 = arith.constant 0 : i32
    return %c0_i32, %c0_i32_0 : i32, i32
  }
  func.func @transform_3(%arg0: i32) -> (i32, i32) {
    %c0_i32 = arith.constant 0 : i32
    %c0_i32_0 = arith.constant 0 : i32
    %c0_i32_1 = arith.constant 0 : i32
    return %c0_i32, %c0_i32_0 : i32, i32
  }
  func.func @transform_4(%arg0: i32) -> (i32, i32) {
    %c0_i32 = arith.constant 0 : i32
    %c0_i32_0 = arith.constant 0 : i32
    %c0_i32_1 = arith.constant 0 : i32
    return %c0_i32, %c0_i32_0 : i32, i32
  }
  func.func @transform_5(%arg0: i32) -> (i32, i32, i32) {
    %c0_i32 = arith.constant 0 : i32
    %c0_i32_0 = arith.constant 0 : i32
    %c0_i32_1 = arith.constant 0 : i32
    return %arg0, %c0_i32, %c0_i32_0 : i32, i32, i32
  }
}

</mosaic_0001>

<llo_original>
// kernel: tpu_custom_call.1
$region0: #{tpu_custom_call.1}
  #allocation0 [shape = 'u32[]', space=smem, size = 0x4, offset = 0x4, fixed_abs, tag = 'smem constant byte address 0x4 - core index']
  #allocation1 [shape = 'u32[72,128]{1,0:T(1,128)}', space=vmem, size = 0x9000, scoped, tag = 'internal scratch']
  %s0 = inlined_call_operand.hbm [shape: f32[2,4,256], index: 0, kind: input, shape index: {}]
  %s1 = inlined_call_operand.hbm [shape: f32[4,4], index: 1, kind: input, shape index: {}]
  %s2 = inlined_call_operand.vmem [shape: f32[1,4], index: 2, kind: input, shape index: {}]
  %s3 = inlined_call_operand.hbm [shape: f32[4,4], index: 3, kind: input, shape index: {}]
  %s4 = inlined_call_operand.vmem [shape: f32[1,4], index: 4, kind: input, shape index: {}]
  %s5 = inlined_call_operand.hbm [shape: f32[2,4,256], index: 5, kind: output, shape index: {}]
  %s6 = sld [smem:[#allocation0]]
  $region42: #{tpu_custom_call.1} parent=0
    _
  %s8 = ssub.s32 1, %s6
  %s9 = scalar_select 0, %s8, %s6
  $region1: #{tpu_custom_call.1} parent=0
    #allocation2 [shape = 'u8[8192]{0}', space=vmem, size = 0x2000, scoped, tag = 'input window, operand 0, single buffered']
    #allocation3 [shape = 's32[1]{0}', space=sflag, size = 0x4, scoped, tag = 'scoped memory for tpu_custom_call.1']
    #allocation4 [shape = 's32[1]{0}', space=sflag, size = 0x4, scoped, tag = 'scoped memory for tpu_custom_call.1']
    #allocation5 [shape = 'u8[2048]{0}', space=vmem, size = 0x800, scoped, tag = 'input window, operand 1, single buffered']
    #allocation6 [shape = 's32[1]{0}', space=sflag, size = 0x4, scoped, tag = 'scoped memory for tpu_custom_call.1']
    #allocation7 [shape = 'u8[2048]{0}', space=vmem, size = 0x800, scoped, tag = 'input window, operand 3, single buffered']
    #allocation8 [shape = 'u8[8192]{0}', space=vmem, size = 0x2000, scoped, tag = 'output window, operand 0, single buffered']
    %10 = vsyncpa [#allocation3], 0
    %11 = vsyncpa [#allocation6], 0
    %12 = vsyncpa [#allocation4], 0
    // Predicated region
    $region2: #{tpu_custom_call.1} parent=1 // pred_check
      _
    $region3: #{tpu_custom_call.1} parent=1 // pred_check_branch
      %14 = sbr.rel (0) target = $region5
    $region4: #{tpu_custom_call.1} parent=1 // pred_region
      %16 = vsyncadd [#allocation3], 0
      %s17 = sshll.u32 %s0, 4
      %s18 = int_to_ptr.hbm [resolvable:$true] %s17
      %s19 = sshll.u32 [#allocation2], 4
      %s20 = int_to_ptr.vmem [resolvable:$true] %s19
      %25 = dma.hbm_to_vmem [thread:$0]  %s18, 256, %s20, [#allocation3], 128, 128, 8
    $region5: #{tpu_custom_call.1} parent=1 // pred_fallthru
      _
    // Predicated region
    $region6: #{tpu_custom_call.1} parent=1 // pred_check
      _
    $region7: #{tpu_custom_call.1} parent=1 // pred_check_branch
      %27 = sbr.rel (0) target = $region9
    $region8: #{tpu_custom_call.1} parent=1 // pred_region
      %29 = vsyncadd [#allocation6], 0
      %s31 = sshll.u32 %s1, 4
      %s32 = int_to_ptr.hbm [resolvable:$true] %s31
      %s33 = sshll.u32 [#allocation5], 4
      %s34 = int_to_ptr.vmem [resolvable:$true] %s33
      %36 = dma.hbm_to_vmem [thread:$0]  %s32, 64, %s34, [#allocation6]
    $region9: #{tpu_custom_call.1} parent=1 // pred_fallthru
      _
    // Predicated region
    $region10: #{tpu_custom_call.1} parent=1 // pred_check
      _
    $region11: #{tpu_custom_call.1} parent=1 // pred_check_branch
      %38 = sbr.rel (0) target = $region13
    $region12: #{tpu_custom_call.1} parent=1 // pred_region
      _
    $region13: #{tpu_custom_call.1} parent=1 // pred_fallthru
      _
    // Predicated region
    $region14: #{tpu_custom_call.1} parent=1 // pred_check
      _
    $region15: #{tpu_custom_call.1} parent=1 // pred_check_branch
      %40 = sbr.rel (0) target = $region17
    $region16: #{tpu_custom_call.1} parent=1 // pred_region
      %42 = vsyncadd [#allocation6], 0
      %s44 = sshll.u32 %s3, 4
      %s45 = int_to_ptr.hbm [resolvable:$true] %s44
      %s46 = sshll.u32 [#allocation7], 4
      %s47 = int_to_ptr.vmem [resolvable:$true] %s46
      %49 = dma.hbm_to_vmem [thread:$0]  %s45, 64, %s47, [#allocation6]
    $region17: #{tpu_custom_call.1} parent=1 // pred_fallthru
      _
    // Predicated region
    $region18: #{tpu_custom_call.1} parent=1 // pred_check
      _
    $region19: #{tpu_custom_call.1} parent=1 // pred_check_branch
      %51 = sbr.rel (0) target = $region21
    $region20: #{tpu_custom_call.1} parent=1 // pred_region
      _
    $region21: #{tpu_custom_call.1} parent=1 // pred_fallthru
      _
    // Predicated region
    $region22: #{tpu_custom_call.1} parent=1 // pred_check
      _
    $region23: #{tpu_custom_call.1} parent=1 // pred_check_branch
      %53 = sbr.rel (0) target = $region25
    $region24: #{tpu_custom_call.1} parent=1 // pred_region
      %55 = dma.done [#allocation3], 256
    $region25: #{tpu_custom_call.1} parent=1 // pred_fallthru
      _
    // Predicated region
    $region26: #{tpu_custom_call.1} parent=1 // pred_check
      _
    $region27: #{tpu_custom_call.1} parent=1 // pred_check_branch
      %57 = sbr.rel (0) target = $region29
    $region28: #{tpu_custom_call.1} parent=1 // pred_region
      %59 = dma.done [#allocation6], 64
    $region29: #{tpu_custom_call.1} parent=1 // pred_fallthru
      _
    // Predicated region
    $region30: #{tpu_custom_call.1} parent=1 // pred_check
      _
    $region31: #{tpu_custom_call.1} parent=1 // pred_check_branch
      %61 = sbr.rel (0) target = $region33
    $region32: #{tpu_custom_call.1} parent=1 // pred_region
      %63 = dma.done [#allocation6], 64
    $region33: #{tpu_custom_call.1} parent=1 // pred_fallthru
      _
    %v64 = vld [vmem:[#allocation2] sm:$0xff]
    %v65 = vld [vmem:[#allocation2 + $0x8] sm:$0xff]
    %68 = vst [vmem:[#allocation1] ss:$2 sm:$0xff] %v64
    %v69 = vld.sshfl [vmem:[#allocation1] sm:$0xff pattern:$0x75316420]
    %v70 = vld.sshfl [vmem:[#allocation1 + $0x8] sm:$0xff pattern:$0x75316420]
    %s71 = scalar_lea.vmem [#allocation1], 16
    %72 = vst [vmem:[%s71] ss:$2 sm:$0xff] %v65
    %v73 = vld.sshfl [vmem:[#allocation1 + $0x10] sm:$0xff pattern:$0x75316420]
    %v74 = vld.sshfl [vmem:[#allocation1 + $0x18] sm:$0xff pattern:$0x75316420]
    %vm79 = vcmask 1043456
    %v80 = vsel %vm79, %v69, 0.0
    %v81 = vsel %vm79, %v70, 0.0
    %v82 = vadd.f32 %v80, %v81
    %83 = vadd.xlane.f32.xlu0 %v82
    %v84 = vpop.xlane.xlu0 %83
    %v85 = vsel %vm79, %v73, 0.0
    %v86 = vsel %vm79, %v74, 0.0
    %v87 = vadd.f32 %v85, %v86
    %88 = vadd.xlane.f32.xlu0 %v87
    %v89 = vpop.xlane.xlu0 %88
    %v90 = vmul.f32 %v84, 0.00390625
    %v91 = vmul.f32 %v89, 0.00390625
    %v92 = vld [vmem:[#allocation5] sm:$0xf]
    %v93 = vld [vmem:[%s2] sm:$0x1]
    %v95 = vperm.slane %v93, 0
    %v99 = vlaneseq
    %v100 = vand.u32 %v99, 127
    %v101 = vperm.slane %v90, %v100
    %v102 = vperm.slane %v91, %v100
    %vm103 = vcmask 1041409
    %v104 = vsel %vm103, %v102, %v101
    %vm105 = vcmask 31744
    %v106 = vsel %vm105, %v104, 0
    %v109 = vsel %vm79, %v92, 0
    %111 = vmatpush.msra.mxu0 0.0
    %112 = vmatpush.msra.mxu0 0.0
    %113 = vmatpush.msra.mxu0 0.0
    %114 = vmatpush.msra.mxu0 0.0
    %115 = vmatpush.msra.mxu0 0.0
    %116 = vmatpush.msra.mxu0 0.0
    %117 = vmatpush.msra.mxu0 0.0
    %118 = vmatpush.msra.mxu0 0.0
    %119 = vmatpush.msra.mxu0 0.0
    %120 = vmatpush.msra.mxu0 0.0
    %121 = vmatpush.msra.mxu0 0.0
    %122 = vmatpush.msra.mxu0 0.0
    %123 = vmatpush.msra.mxu0 0.0
    %124 = vmatpush.msra.mxu0 0.0
    %125 = vmatpush.msra.mxu0 0.0
    %126 = vmatpush.msra.mxu0 %v109
    %127 = vmatmul.f32.gmra.mxu0 %v106
    %v128 = vpop.f32.mrf.mxu0
    %v129 = vadd.f32 %v95, %v128
    %130 = vdwg.mxu0
    %v131 = vmax.f32 %v129, 0.0
    %v132 = vld [vmem:[#allocation7] sm:$0xf]
    %v133 = vld [vmem:[%s4] sm:$0x1]
    %v135 = vperm.slane %v133, 0
    %v138 = vsel %vm105, %v131, 0
    %v141 = vsel %vm79, %v132, 0
    %143 = vmatpush.msra.mxu0 0.0
    %144 = vmatpush.msra.mxu0 0.0
    %145 = vmatpush.msra.mxu0 0.0
    %146 = vmatpush.msra.mxu0 0.0
    %147 = vmatpush.msra.mxu0 0.0
    %148 = vmatpush.msra.mxu0 0.0
    %149 = vmatpush.msra.mxu0 0.0
    %150 = vmatpush.msra.mxu0 0.0
    %151 = vmatpush.msra.mxu0 0.0
    %152 = vmatpush.msra.mxu0 0.0
    %153 = vmatpush.msra.mxu0 0.0
    %154 = vmatpush.msra.mxu0 0.0
    %155 = vmatpush.msra.mxu0 0.0
    %156 = vmatpush.msra.mxu0 0.0
    %157 = vmatpush.msra.mxu0 0.0
    %158 = vmatpush.msra.mxu0 %v141
    %159 = vmatmul.f32.gmra.mxu0 %v138
    %v160 = vpop.f32.mrf.mxu0
    %v161 = vadd.f32 %v135, %v160
    %162 = vdwg.mxu0
    %v163 = vxor.u32 %v161, 2147483648
    %v164 = vmul.f32 %v163, 1.442695
    %v165 = vpow.pop %v164
    %v166 = vadd.f32 %v165, 1.0
    %v167 = vrcp.pop %v166
    %v168 = vmul.f32 %v166, %v167
    %v169 = vsub.f32 1.0, %v168
    %v170 = vmul.f32 %v167, %v169
    %v171 = vadd.f32 %v167, %v170
    %vm172 = vweird.f32 %v166
    %vm173 = vweird.f32 %v167
    %vm174 = vmor %vm172, %vm173
    %v175 = vsel %vm174, %v167, %v171
    %v176 = vand.u32 2147483647, %v166
    %vm177 = vcmp.eq.f32.partialorder %v176, 8.507059e+37
    %v178 = vand.u32 %v166, 2147483648
    %v179 = vor.u32 1.1754944e-38, %v178
    %v180 = vsel %vm177, %v179, %v175
    %v181 = vmul.f32 1.0, %v180
    %v182 = vperm.slane %v181, 0
    %v183 = vlaneseq
    %v184 = vshrl.u32 %v183, 7
    %186 = vset.pattern.permute.xlu0 %v184
    %187 = vperm.xlu0 %186, %v182
    %v188 = vpop.permute.xlu0 %187
    %v189 = vperm.slane %v181, 1
    %v190 = vlaneseq
    %v191 = vshrl.u32 %v190, 7
    %193 = vset.pattern.permute.xlu0 %v191
    %194 = vperm.xlu0 %193, %v189
    %v195 = vpop.permute.xlu0 %194
    %v199 = vunpack.c.l.s4 839922192
    %v200 = vunpack.c.0.s8 %v199
    %v201 = vperm.slane %v188, %v200
    %v203 = vunpack.c.l.s4 839922192
    %v204 = vunpack.c.0.s8 %v203
    %v205 = vperm.slane %v195, %v204
    %v208 = vmul.f32 %v64, %v201
    %v209 = vmul.f32 %v65, %v205
    %210 = vst [vmem:[#allocation8] sm:$0xff] %v208
    %211 = vst [vmem:[#allocation8 + $0x8] sm:$0xff] %v209
    // Predicated region
    $region34: #{tpu_custom_call.1} parent=1 // pred_check
      _
    $region35: #{tpu_custom_call.1} parent=1 // pred_check_branch
      %213 = sbr.rel (0) target = $region37
    $region36: #{tpu_custom_call.1} parent=1 // pred_region
      %215 = vsyncadd [#allocation4], 0
      %s216 = sshll.u32 [#allocation8], 4
      %s217 = int_to_ptr.vmem [resolvable:$true] %s216
      %s218 = sshll.u32 %s5, 4
      %s219 = int_to_ptr.hbm [resolvable:$true] %s218
      %224 = dma.vmem_to_hbm [thread:$0]  %s217, 256, %s219, [#allocation4], 128, 128, 8
    $region37: #{tpu_custom_call.1} parent=1 // pred_fallthru
      _
    // Predicated region
    $region38: #{tpu_custom_call.1} parent=1 // pred_check
      _
    $region39: #{tpu_custom_call.1} parent=1 // pred_check_branch
      %226 = sbr.rel (0) target = $region41
    $region40: #{tpu_custom_call.1} parent=1 // pred_region
      %228 = dma.done [#allocation4], 256
    $region41: #{tpu_custom_call.1} parent=1 // pred_fallthru
      _
    %229 = vsyncpa [#allocation3], 1
    %230 = vsyncpa [#allocation6], 1
    %231 = vsyncpa [#allocation4], 1

</llo_original>
